<compile_context>
chip_gen: v7x
topology: tpu7x:2x2x1
jax: 0.10.0
libtpu: 0.0.40
codegen_flags: <defaults>
</compile_context>

<pallas_src>
import functools
import math
from typing import Optional, Sequence, Union

import numpy as np
import jax
import jax.numpy as jnp
from jax.experimental import pallas as pl
from jax.experimental.pallas import tpu as pltpu


_LANE = 128
_SUBLANE = 8
_PI_2 = math.pi / 2.0
_VMEM_BLOCK_BUDGET = 6 * 1024 * 1024    # target bytes per output block
_VMEM_LIMIT_CAP = 48 * 1024 * 1024      # safe on v5e/v6e (128 MiB) and v7x (64 MiB)


def _round_up(x: int, m: int) -> int:
    return ((x + m - 1) // m) * m


def _choose_row_tile(n_rows: int, width: int) -> int:
    """Row tile (multiple of 8, or the full row count) sized to ~_VMEM_BLOCK_BUDGET,
    keeping >=2 grid steps when possible (megacore sharding on v7x)."""
    row_bytes = max(width, 1) * 4
    budget_rows = max(_SUBLANE,
                      (_VMEM_BLOCK_BUDGET // row_bytes) // _SUBLANE * _SUBLANE)
    if n_rows <= _SUBLANE:
        return max(n_rows, 1)                     # single full block
    half = _round_up((n_rows + 1) // 2, _SUBLANE)
    return max(_SUBLANE, min(budget_rows, half, _round_up(n_rows, _SUBLANE)))


def _fold_factor(n_rows: int, row_width: int) -> int:
    """Largest power-of-two F dividing n_rows such that F*row_width approaches a
    multiple of 128 lanes (F0 = 128 / gcd(width, 128) makes it exact)."""
    f = _LANE // math.gcd(row_width, _LANE)
    while f > 1 and n_rows % f != 0:
        f //= 2
    return f


def _inv_dim_t(out_channels: int, temperature: float) -> np.ndarray:
    pos_dim = out_channels // 2
    dim_t = np.power(float(temperature),
                     np.arange(pos_dim, dtype=np.float64) / float(pos_dim))
    return 1.0 / dim_t                            # float64; cast at pattern build


def _mosaic_params(out_block_bytes: int, in_bytes: int) -> pltpu.CompilerParams:
    # double-buffered output + elementwise temporaries + inputs + headroom
    need = 4 * out_block_bytes + 2 * in_bytes + (4 << 20)
    limit = int(min(_VMEM_LIMIT_CAP, max(32 << 20, need)))
    return pltpu.CompilerParams(dimension_semantics=("parallel",),
                                vmem_limit_bytes=limit)


# ----------------------------------------------------------------------------
# Host-side per-lane angle patterns  (angle = pos * A + B ; out = cos(angle))
# ----------------------------------------------------------------------------
def _patterns_1d_size(out_channels, temperature, fold):
    c = out_channels
    p = c // 2
    inv = _inv_dim_t(c, temperature)
    lane = np.arange(fold * c)
    f = lane // c                                  # folded-row offset
    j = lane % c                                   # output channel
    q = np.where(j < p, j, j - p)                  # frequency index
    phase = np.where(j < p, 0.0, _PI_2)            # sin(x) = cos(x - pi/2)
    inv_l = inv[q]
    a = fold * inv_l                               # position = row*fold + f
    b = f * inv_l - phase
    return a.astype(np.float32)[None, :], b.astype(np.float32)[None, :]


def _patterns_1d_pos(out_channels, temperature, fold):
    c = out_channels
    p = c // 2
    inv = _inv_dim_t(c, temperature)
    lane = np.arange(fold * c)
    f = lane // c
    j = lane % c
    q = np.where(j < p, j, j - p)
    phase = np.where(j < p, 0.0, _PI_2)
    a = np.zeros((fold, fold * c), dtype=np.float64)
    a[f, lane] = inv[q]                            # lane group f uses pos column f
    b = -phase
    return a.astype(np.float32), b.astype(np.float32)[None, :]


def _patterns_2d_size(out_channels, temperature, w):
    # One kernel row per grid_h value; lanes cover all w columns, h/w interleaved
    # so a row-major reshape of (h, w*2C) -> (h*w, C, 2) matches torch.stack(..., -1).
    c = out_channels
    p = c // 2
    inv = _inv_dim_t(c, temperature)
    lane = np.arange(w * 2 * c)
    ww = lane // (2 * c)                           # grid_w baked into the pattern
    j = lane % (2 * c)
    q = j // 2                                     # output channel
    sel_w = (j % 2).astype(np.float64)             # 0 -> grid_h lane, 1 -> grid_w lane
    freq = np.where(q < p, q, q - p)
    phase = np.where(q < p, 0.0, _PI_2)
    inv_l = inv[freq]
    a = (1.0 - sel_w) * inv_l                      # coefficient of the row index (grid_h)
    b = sel_w * ww * inv_l - phase                 # grid_w term is constant per lane
    return a.astype(np.float32)[None, :], b.astype(np.float32)[None, :]


def _patterns_2d_pos(out_channels, temperature):
    c = out_channels
    p = c // 2
    inv = _inv_dim_t(c, temperature)
    lane = np.arange(2 * c)
    q = lane // 2
    sel = lane % 2                                 # 0 -> position[...,0], 1 -> position[...,1]
    freq = np.where(q < p, q, q - p)
    phase = np.where(q < p, 0.0, _PI_2)
    a = np.zeros((2, 2 * c), dtype=np.float64)
    a[sel, lane] = inv[freq]
    b = -phase
    return a.astype(np.float32), b.astype(np.float32)[None, :]


# ----------------------------------------------------------------------------
# Pallas kernels
# ----------------------------------------------------------------------------
def _affine_cos_kernel(a_ref, b_ref, out_ref, *, tile_rows):
    # a_ref/b_ref: (1, W) f32 ; out_ref: (tile_rows, W) f32
    base = pl.program_id(0) * tile_rows
    r = (base + jax.lax.broadcasted_iota(jnp.int32, (tile_rows, 1), 0)
         ).astype(jnp.float32)
    out_ref[...] = jnp.cos(r * a_ref[...] + b_ref[...])


def _pos_cos_kernel(pos_ref, a_ref, b_ref, out_ref, *, n_terms):
    # pos_ref: (tile, K) f32 ; a_ref: (K, W) f32 ; b_ref: (1, W) f32
    ang = b_ref[...]
    for k in range(n_terms):                       # K is tiny (<= fold factor)
        ang = ang + pos_ref[:, k:k + 1] * a_ref[k:k + 1, :]
    out_ref[...] = jnp.cos(ang)


# ----------------------------------------------------------------------------
# pallas_call launchers
# ----------------------------------------------------------------------------
def _launch_affine(n_rows, width, a_np, b_np):
    tile = _choose_row_tile(n_rows, width)
    kernel = functools.partial(_affine_cos_kernel, tile_rows=tile)
    out_block_bytes = tile * width * 4
    in_bytes = 2 * width * 4
    # TODO(synk): for extreme w*out_channels (single 8-row slab > VMEM budget) a
    # second grid axis over the lane dimension would be needed.
    return pl.pallas_call(
        kernel,
        out_shape=jax.ShapeDtypeStruct((n_rows, width), jnp.float32),
        grid=(pl.cdiv(n_rows, tile),),
        in_specs=[pl.BlockSpec((1, width), lambda i: (0, 0)),
                  pl.BlockSpec((1, width), lambda i: (0, 0))],
        out_specs=pl.BlockSpec((tile, width), lambda i: (i, 0)),
        compiler_params=_mosaic_params(out_block_bytes, in_bytes),
        cost_estimate=pl.CostEstimate(
            flops=int(2 * n_rows * width),
            transcendentals=int(n_rows * width),
            bytes_accessed=int(n_rows * width * 4 + in_bytes)),
    )(jnp.asarray(a_np), jnp.asarray(b_np))


def _launch_pos(pos2d, a_np, b_np):
    n_rows, n_terms = int(pos2d.shape[0]), int(pos2d.shape[1])
    width = int(a_np.shape[1])
    tile = _choose_row_tile(n_rows, width)
    kernel = functools.partial(_pos_cos_kernel, n_terms=n_terms)
    out_block_bytes = tile * width * 4
    in_bytes = (tile * n_terms + (n_terms + 1) * width) * 4
    return pl.pallas_call(
        kernel,
        out_shape=jax.ShapeDtypeStruct((n_rows, width), jnp.float32),
        grid=(pl.cdiv(n_rows, tile),),
        in_specs=[pl.BlockSpec((tile, n_terms), lambda i: (i, 0)),
                  pl.BlockSpec((n_terms, width), lambda i: (0, 0)),
                  pl.BlockSpec((1, width), lambda i: (0, 0))],
        out_specs=pl.BlockSpec((tile, width), lambda i: (i, 0)),
        compiler_params=_mosaic_params(out_block_bytes, in_bytes),
        cost_estimate=pl.CostEstimate(
            flops=int(2 * (n_terms + 1) * n_rows * width),
            transcendentals=int(n_rows * width),
            bytes_accessed=int((n_rows * width + n_rows * n_terms
                                + (n_terms + 1) * width) * 4)),
    )(pos2d, jnp.asarray(a_np), jnp.asarray(b_np))


# ----------------------------------------------------------------------------
# Path wrappers
# ----------------------------------------------------------------------------
def _pe_1d_from_size(n, out_channels, temperature):
    fold = _fold_factor(n, out_channels)
    a, b = _patterns_1d_size(out_channels, temperature, fold)
    out = _launch_affine(n // fold, fold * out_channels, a, b)
    return out.reshape(n, out_channels)                       # free reshape


def _pe_1d_from_position(pos_flat, out_channels, temperature):
    n = int(pos_flat.shape[0])
    fold = _fold_factor(n, out_channels)
    a, b = _patterns_1d_pos(out_channels, temperature, fold)
    pos2d = pos_flat.astype(jnp.float32).reshape(n // fold, fold)
    out = _launch_pos(pos2d, a, b)
    return out.reshape(n, out_channels)                       # free reshape


def _pe_2d_from_size(h, w, out_channels, temperature):
    a, b = _patterns_2d_size(out_channels, temperature, w)
    out = _launch_affine(h, w * 2 * out_channels, a, b)       # (h, w*2C)
    return out.reshape(h * w, out_channels, 2)                # torch stack layout


def _pe_2d_from_position(pos2, out_channels, temperature):
    # pos2: (N, 2) float positions (columns = grid_h, grid_w)
    a, b = _patterns_2d_pos(out_channels, temperature)
    out = _launch_pos(pos2.astype(jnp.float32), a, b)         # (N, 2C)
    return out.reshape(int(pos2.shape[0]), out_channels, 2)   # torch stack layout


# ----------------------------------------------------------------------------
# Module wrapper (setup / caching / layout glue in plain JAX)
# ----------------------------------------------------------------------------
class SinePositionalEncoding:
    def __init__(self,
                 out_channels: int,
                 spatial_dim: int = 1,
                 temperature: float = 1e5,
                 learnable: bool = False,
                 eval_size: Optional[Union[int, Sequence[int]]] = None):
        assert out_channels % 2 == 0
        assert temperature > 0
        self.spatial_dim = spatial_dim
        self.out_channels = out_channels
        self.temperature = float(temperature)
        self.eval_size = eval_size
        # TODO(synk): learnable dim_t is not threaded into the kernel; the
        # frequency patterns are baked host-side constants (non-learnable case).
        self.learnable = learnable

        pos_dim = out_channels // 2
        self.dim_t = self.temperature ** (
            jnp.arange(pos_dim, dtype=jnp.float32) / float(pos_dim))

        self._cache = {}
        if eval_size:
            self._cache[self._key(eval_size)] = self.generate_pos_encoding(
                size=eval_size)

    @staticmethod
    def _key(size):
        return tuple(size) if isinstance(size, (tuple, list)) else size

    def __call__(self, *args, **kwargs):
        return self.generate_pos_encoding(*args, **kwargs)

    def generate_pos_encoding(self, size=None,
                              position: Optional[jax.Array] = None):
        assert (size is not None) ^ (position is not None)

        if (not self.learnable) and size is not None and \
                self._key(size) in self._cache:
            return self._cache[self._key(size)]

        if self.spatial_dim == 1:
            if size is not None:
                if isinstance(size, (tuple, list)):
                    size = size[0]
                return _pe_1d_from_size(int(size), self.out_channels,
                                        self.temperature)            # (N, C)
            lead_shape = position.shape
            enc = _pe_1d_from_position(position.reshape(-1),
                                       self.out_channels, self.temperature)
            return enc.reshape(*lead_shape, self.out_channels)

        elif self.spatial_dim == 2:
            if size is not None:
                if isinstance(size, (tuple, list)):
                    h, w = size[:2]
                elif isinstance(size, (int, float)):
                    h, w = int(size), int(size)
                else:
                    raise ValueError(f'got invalid type {type(size)} for size')
                return _pe_2d_from_size(int(h), int(w), self.out_channels,
                                        self.temperature)        # (h*w, C, 2)
            assert position.shape[-1] == 2
            lead_shape = position.shape[:-1]
            enc = _pe_2d_from_position(position.reshape(-1, 2),
                                       self.out_channels, self.temperature)
            return enc.reshape(*lead_shape, self.out_channels, 2)

        else:
            raise ValueError(f'unsupported spatial_dim {self.spatial_dim}')


# ----------------------------------------------------------------------------
# Pure-jnp references (mirror of the torch math) for correctness checks.
# ----------------------------------------------------------------------------
def _ref_1d(position, dim_t):
    freq = position[..., None] / dim_t.reshape(*(1,) * position.ndim, -1)
    return jnp.concatenate([jnp.cos(freq), jnp.sin(freq)], axis=-1)


def _ref_2d_from_size(h, w, dim_t):
    gh, gw = jnp.meshgrid(jnp.arange(h, dtype=jnp.float32),
                          jnp.arange(w, dtype=jnp.float32), indexing='ij')
    gh, gw = gh.reshape(-1), gw.reshape(-1)
    fh = gh[:, None] / dim_t[None, :]
    fw = gw[:, None] / dim_t[None, :]
    eh = jnp.concatenate([jnp.cos(fh), jnp.sin(fh)], axis=-1)
    ew = jnp.concatenate([jnp.cos(fw), jnp.sin(fw)], axis=-1)
    return jnp.stack((eh, ew), axis=-1)


def _ref_2d_from_pos(position, dim_t):
    gh = position[..., 0]
    gw = position[..., 1]
    fh = gh[..., None] / dim_t
    fw = gw[..., None] / dim_t
    eh = jnp.concatenate([jnp.cos(fh), jnp.sin(fh)], axis=-1)
    ew = jnp.concatenate([jnp.cos(fw), jnp.sin(fw)], axis=-1)
    return jnp.stack((eh, ew), axis=-1)


if __name__ == "__main__":
    key = jax.random.PRNGKey(0)

    out_channels = 32          # pos_dim = 16 (exercises lane folding, F = 4)
    temperature = 1e5
    RTOL, ATOL = 1e-5, 5e-5    # phase-trick + reciprocal-multiply: few-ulp angle delta

    # --- spatial_dim=1, size-based (coords generated in-kernel, folded lanes) ---
    pe1 = SinePositionalEncoding(out_channels, spatial_dim=1,
                                 temperature=temperature)
    enc_1d = jax.block_until_ready(pe1(size=16))                 # (16, 32)
    ref_1d = _ref_1d(jnp.arange(16, dtype=jnp.float32), pe1.dim_t)
    assert enc_1d.shape == (16, out_channels)
    np.testing.assert_allclose(np.asarray(enc_1d), np.asarray(ref_1d),
                               rtol=RTOL, atol=ATOL)

    # --- spatial_dim=1, position-based (batched positions, folded lanes) ---
    pos = jax.random.uniform(key, (2, 8), dtype=jnp.float32) * 16.0
    enc_1d_pos = jax.block_until_ready(pe1(position=pos))        # (2, 8, 32)
    ref_1d_pos = _ref_1d(pos, pe1.dim_t)
    assert enc_1d_pos.shape == (2, 8, out_channels)
    np.testing.assert_allclose(np.asarray(enc_1d_pos), np.asarray(ref_1d_pos),
                               rtol=RTOL, atol=ATOL)

    # --- spatial_dim=2, size-based grid (single interleaved kernel output) ---
    pe2 = SinePositionalEncoding(out_channels, spatial_dim=2,
                                 temperature=temperature)
    enc_2d = jax.block_until_ready(pe2(size=(8, 8)))             # (64, 32, 2)
    ref_2d = _ref_2d_from_size(8, 8, pe2.dim_t)
    assert enc_2d.shape == (64, out_channels, 2)
    np.testing.assert_allclose(np.asarray(enc_2d), np.asarray(ref_2d),
                               rtol=RTOL, atol=ATOL)

    # --- spatial_dim=2, position-based (multi-block grid exercised: N=24, tile=16) ---
    pos2 = jax.random.uniform(jax.random.PRNGKey(1), (4, 6, 2),
                              dtype=jnp.float32) * 8.0
    enc_2d_pos = jax.block_until_ready(pe2(position=pos2))       # (4, 6, 32, 2)
    ref_2d_pos = _ref_2d_from_pos(pos2, pe2.dim_t)
    assert enc_2d_pos.shape == (4, 6, out_channels, 2)
    np.testing.assert_allclose(np.asarray(enc_2d_pos), np.asarray(ref_2d_pos),
                               rtol=RTOL, atol=ATOL)

    print("KERNEL_OK")
</pallas_src>

<mosaic_0001>
module attributes {stable_mosaic.version = 11 : i64} {
  func.func @_affine_cos_kernel(%arg0: i32, %arg1: memref<1x128xf32, #tpu.memory_space<vmem>>, %arg2: memref<1x128xf32, #tpu.memory_space<vmem>>, %arg3: memref<4x128xf32, #tpu.memory_space<vmem>>) attributes {dimension_semantics = [#tpu.dimension_semantics<parallel>], iteration_bounds = array<i64: 1>, scalar_prefetch = 0 : i64, scratch_operands = 0 : i64, tpu.core_type = #tpu.core_type<tc>, window_params = [{pipeline_mode = #tpu.pipeline_mode<synchronous>, transform_indices = @transform_0, window_bounds = array<i64: 1, 128>}, {pipeline_mode = #tpu.pipeline_mode<synchronous>, transform_indices = @transform_1, window_bounds = array<i64: 1, 128>}, {transform_indices = @transform_2, window_bounds = array<i64: 4, 128>}]} {
    %c4_i32 = arith.constant 4 : i32
    %0 = arith.muli %arg0, %c4_i32 : i32
    %1 = tpu.iota {dimensions = array<i32: 0>} : vector<4x1xi32>
    %2 = vector.broadcast %0 : i32 to vector<4x1xi32>
    %3 = arith.addi %2, %1 : vector<4x1xi32>
    %4 = arith.sitofp %3 : vector<4x1xi32> to vector<4x1xf32>
    %c0 = arith.constant 0 : index
    %c0_0 = arith.constant 0 : index
    %5 = vector.load %arg1[%c0, %c0_0] : memref<1x128xf32, #tpu.memory_space<vmem>>, vector<1x128xf32>
    %6 = vector.broadcast %4 : vector<4x1xf32> to vector<4x128xf32>
    %7 = vector.broadcast %5 : vector<1x128xf32> to vector<4x128xf32>
    %8 = arith.mulf %6, %7 : vector<4x128xf32>
    %c0_1 = arith.constant 0 : index
    %c0_2 = arith.constant 0 : index
    %9 = vector.load %arg2[%c0_1, %c0_2] : memref<1x128xf32, #tpu.memory_space<vmem>>, vector<1x128xf32>
    %10 = vector.broadcast %9 : vector<1x128xf32> to vector<4x128xf32>
    %11 = arith.addf %8, %10 : vector<4x128xf32>
    %12 = math.cos %11 : vector<4x128xf32>
    %c0_3 = arith.constant 0 : index
    %c0_4 = arith.constant 0 : index
    %13 = vector.load %arg3[%c0_3, %c0_4] : memref<4x128xf32, #tpu.memory_space<vmem>>, vector<4x128xf32>
    tpu.vector_store %arg3[%c0_3, %c0_4], %12 {strides = array<i32>} : memref<4x128xf32, #tpu.memory_space<vmem>>, vector<4x128xf32>,
    return
  }
  func.func @transform_0(%arg0: i32) -> (i32, i32) {
    %c0_i32 = arith.constant 0 : i32
    %c0_i32_0 = arith.constant 0 : i32
    %c0_i32_1 = arith.constant 0 : i32
    return %c0_i32, %c0_i32_0 : i32, i32
  }
  func.func @transform_1(%arg0: i32) -> (i32, i32) {
    %c0_i32 = arith.constant 0 : i32
    %c0_i32_0 = arith.constant 0 : i32
    %c0_i32_1 = arith.constant 0 : i32
    return %c0_i32, %c0_i32_0 : i32, i32
  }
  func.func @transform_2(%arg0: i32) -> (i32, i32) {
    %c0_i32 = arith.constant 0 : i32
    %c0_i32_0 = arith.constant 0 : i32
    return %arg0, %c0_i32 : i32, i32
  }
}

</mosaic_0001>

<llo_original>
// kernel: tpu_custom_call.1
$region0: #{tpu_custom_call.1}
  #allocation0 [shape = 'u32[]', space=smem, size = 0x4, offset = 0x4, fixed_abs, tag = 'smem constant byte address 0x4 - core index']
  #allocation1 [shape = 'u32[144,128]{1,0:T(1,128)}', space=vmem, size = 0x12000, scoped, tag = 'internal scratch']
  %s0 = inlined_call_operand.hbm [shape: f32[1,128], index: 0, kind: input, shape index: {}]
  %s1 = inlined_call_operand.vmem [shape: f32[1,128], index: 1, kind: input, shape index: {}]
  %s2 = inlined_call_operand.hbm [shape: f32[4,128], index: 2, kind: output, shape index: {}]
  %s3 = sld [smem:[#allocation0]]
  $region22: #{tpu_custom_call.1} parent=0
    _
  %s5 = ssub.s32 1, %s3
  %s6 = scalar_select 0, %s5, %s3
  $region1: #{tpu_custom_call.1} parent=0
    #allocation2 [shape = 'u8[512]{0}', space=vmem, size = 0x400, scoped, tag = 'input window, operand 0, single buffered']
    #allocation3 [shape = 's32[1]{0}', space=sflag, size = 0x4, scoped, tag = 'scoped memory for tpu_custom_call.1']
    #allocation4 [shape = 's32[1]{0}', space=sflag, size = 0x4, scoped, tag = 'scoped memory for tpu_custom_call.1']
    #allocation5 [shape = 'u8[2048]{0}', space=vmem, size = 0x800, scoped, tag = 'output window, operand 0, single buffered']
    %7 = vsyncpa [#allocation3], 0
    %8 = vsyncpa [#allocation4], 0
    // Predicated region
    $region2: #{tpu_custom_call.1} parent=1 // pred_check
      _
    $region3: #{tpu_custom_call.1} parent=1 // pred_check_branch
      %10 = sbr.rel (0) target = $region5
    $region4: #{tpu_custom_call.1} parent=1 // pred_region
      %s12 = ssub.s32 16, 16
      %13 = vsyncadd [#allocation3], %s12
      %s15 = sshll.u32 [#allocation2], 4
      %s16 = int_to_ptr.vmem [resolvable:$true] %s15
      %18 = dma.hbm_to_vmem [thread:$0]  %s0, 16, %s16, [#allocation3]
    $region5: #{tpu_custom_call.1} parent=1 // pred_fallthru
      _
    // Predicated region
    $region6: #{tpu_custom_call.1} parent=1 // pred_check
      _
    $region7: #{tpu_custom_call.1} parent=1 // pred_check_branch
      %20 = sbr.rel (0) target = $region9
    $region8: #{tpu_custom_call.1} parent=1 // pred_region
      _
    $region9: #{tpu_custom_call.1} parent=1 // pred_fallthru
      _
    // Predicated region
    $region10: #{tpu_custom_call.1} parent=1 // pred_check
      _
    $region11: #{tpu_custom_call.1} parent=1 // pred_check_branch
      %22 = sbr.rel (0) target = $region13
    $region12: #{tpu_custom_call.1} parent=1 // pred_region
      %23 = dma.done [#allocation3], 16
    $region13: #{tpu_custom_call.1} parent=1 // pred_fallthru
      _
    %s24 = smul.u32 0, 4
    %v25 = vlaneseq
    %v26 = vshrl.u32 %v25, 7
    %v27 = vstv %s24
    %v28 = vadd.s32 %v27, %v26
    %v29 = vcvt.s32.f32 %v28
    %v30 = vld [vmem:[#allocation2] sm:$0x1]
    %v32 = vlaneseq
    %v33 = vshrl.u32 %v32, 7
    %v34 = vsub.s32 0, %v33
    %v35 = vrot.slane %v30, %v34
    %v37 = vmul.f32 %v29, %v35
    %v38 = vld [vmem:[%s1] sm:$0x1]
    %v40 = vlaneseq
    %v41 = vshrl.u32 %v40, 7
    %v42 = vsub.s32 0, %v41
    %v43 = vrot.slane %v38, %v42
    %v45 = vadd.f32 %v37, %v43
    %v46 = vand.u32 2147483647, %v45
    %vm47 = vcmp.le.f32.partialorder %v46, 0.7853982
    %vm48 = vcmp.lt.s32.totalorder %v45, 0
    %v49 = vand.u32 %v45, 2139095040
    %v50 = vshrl.u32 %v49, 23
    %v51 = vsub.s32 %v50, 127
    %v52 = vand.u32 2147483647, %v45
    %v53 = vand.u32 %v52, 8388607
    %v54 = vor.u32 %v53, 8388608
    %v55 = vsub.s32 0, %v54
    %v56 = vadd.s32 %v51, 1
    %vm57 = vcmp.gt.s32.totalorder %v56, 0
    %v58 = vsel %vm57, %v56, 0
    %v59 = vshrl.u32 %v58, 5
    %v60 = vand.u32 %v58, 31
    %v61 = vsub.s32 32, %v60
    %v62 = vshrl.u32 683565275, %v61
    %v63 = vshll.u32 683565275, %v60
    %v64 = vshrl.u32 2475754826, %v61
    %v65 = vor.u32 %v63, %v64
    %v66 = vshll.u32 2475754826, %v60
    %v67 = vshrl.u32 2131351028, %v61
    %v68 = vor.u32 %v66, %v67
    %v69 = vshll.u32 2131351028, %v60
    %v70 = vshrl.u32 2102212464, %v61
    %v71 = vor.u32 %v69, %v70
    %v72 = vshll.u32 2102212464, %v60
    %v73 = vshrl.u32 920167782, %v61
    %v74 = vor.u32 %v72, %v73
    %v75 = vshll.u32 920167782, %v60
    %v76 = vshrl.u32 1326507024, %v61
    %v77 = vor.u32 %v75, %v76
    %vm78 = vcmp.lt.s32.totalorder %v59, 1
    %vm79 = vcmp.lt.s32.totalorder %v59, 2
    %vm80 = vcmp.lt.s32.totalorder %v59, 3
    %vm81 = vcmp.lt.s32.totalorder %v59, 4
    %v82 = vsel %vm78, %v62, %v65
    %v83 = vsel %vm81, %v71, 2102212464
    %v84 = vsel %vm80, %v68, %v83
    %v85 = vsel %vm79, %v82, %v84
    %v86 = vsel %vm78, %v65, %v68
    %v87 = vsel %vm81, %v74, 920167782
    %v88 = vsel %vm80, %v71, %v87
    %v89 = vsel %vm79, %v86, %v88
    %v90 = vsel %vm78, %v68, %v71
    %v91 = vsel %vm81, %v77, 1326507024
    %v92 = vsel %vm80, %v74, %v91
    %v93 = vsel %vm79, %v90, %v92
    %v94 = vshll.u32 %v54, 8
    %v95 = vmul.u32.u64.compose %v94, %v93
    %v96 = vextract.low.u32 %v95
    %v97 = vextract.high.u32 %v95
    %v98 = vmul.u32.u64.compose %v94, %v89
    %v99 = vextract.low.u32 %v98
    %v100 = vextract.high.u32 %v98
    %v101 = vmul.u32 %v94, %v85
    %v102 = vadd.s32 %v97, %v99
    %vm103 = vc.u32 %v97, %v99
    %v104 = vadd.s32 %v100, 1
    %v105 = vsel %vm103, %v104, %v100
    %v106 = vadd.s32 %v101, %v105
    %v107 = vadd.s32 %v106, 536870912
    %v108 = vshrl.u32 %v107, 30
    %v109 = vshll.u32 %v108, 30
    %v110 = vsub.s32 %v106, %v109
    %vm111 = vcmp.lt.s32.totalorder %v110, 0
    %v112 = vsub.s32 0, %v110
    %v113 = vsel %vm111, %v112, %v110
    %v114 = vclz %v113
    %v115 = vsub.s32 %v114, 2
    %vm116 = vcmp.gt.s32.totalorder 0, %v115
    %v117 = vsel %vm116, 0, %v115
    %v118 = vsub.s32 32, %v117
    %v119 = vshll.u32 %v110, %v117
    %v120 = vshrl.u32 %v102, %v118
    %v121 = vor.u32 %v119, %v120
    %v122 = vsub.s32 4294967266, %v117
    %v123 = vadd.s32 %v122, 127
    %v124 = vshll.u32 %v123, 23
    %v125 = vor.u32 4788187, %v124
    %v126 = vand.u32 2147483647, %v125
    %v128 = vcvt.s32.f32 %v121
    %v129 = vmul.f32 %v128, %v126
    %v130 = vxor.u32 %v129, 2147483648
    %v131 = vsel %vm48, %v130, %v129
    %v132 = vsub.s32 4, %v108
    %v133 = vsel %vm48, %v132, %v108
    %v134 = vsel %vm47, %v45, %v131
    %v135 = vsel %vm47, 0, %v133
    %v136 = vcosq.f32.pop %v134
    %v137 = vsinq.f32.pop %v134
    %vm138 = vweird.f32 %v45
    %v139 = vand.u32 %v135, 3
    %vm140 = vcmp.lt.s32.totalorder %v139, 2
    %vm141 = vcmp.eq.s32.totalorder %v139, 0
    %v142 = vxor.u32 %v137, 2147483648
    %v143 = vsel %vm141, %v136, %v142
    %vm144 = vcmp.eq.s32.totalorder %v139, 2
    %v145 = vxor.u32 %v136, 2147483648
    %v146 = vsel %vm144, %v145, %v137
    %v147 = vsel %vm140, %v143, %v146
    %v148 = vsel %vm138, nan, %v147
    %149 = vst [vmem:[#allocation5] sm:$0xf] %v148
    // Predicated region
    $region14: #{tpu_custom_call.1} parent=1 // pred_check
      _
    $region15: #{tpu_custom_call.1} parent=1 // pred_check_branch
      %151 = sbr.rel (0) target = $region17
    $region16: #{tpu_custom_call.1} parent=1 // pred_region
      %s153 = ssub.s32 64, 64
      %154 = vsyncadd [#allocation4], %s153
      %s156 = sshll.u32 [#allocation5], 4
      %s157 = int_to_ptr.vmem [resolvable:$true] %s156
      %159 = dma.vmem_to_hbm [thread:$0]  %s157, 64, %s2, [#allocation4]
    $region17: #{tpu_custom_call.1} parent=1 // pred_fallthru
      _
    // Predicated region
    $region18: #{tpu_custom_call.1} parent=1 // pred_check
      _
    $region19: #{tpu_custom_call.1} parent=1 // pred_check_branch
      %161 = sbr.rel (0) target = $region21
    $region20: #{tpu_custom_call.1} parent=1 // pred_region
      %162 = dma.done [#allocation4], 64
    $region21: #{tpu_custom_call.1} parent=1 // pred_fallthru
      _
    %163 = vsyncpa [#allocation3], 1
    %164 = vsyncpa [#allocation4], 1

</llo_original>
